<compile_context>
chip_gen: v7x
topology: tpu7x:2x2x1
jax: 0.10.0
libtpu: 0.0.40
codegen_flags: <defaults>
</compile_context>

<pallas_src>
import functools

import jax
import jax.numpy as jnp
from jax.experimental import pallas as pl
from jax.experimental.pallas import tpu as pltpu


def _wmse_ps_kernel(y_ref, yp_ref, std_ref, mean_ref, wsum_ref, wmax_ref,
                    *, emax, tm, wc, n_valid, masked):
    # std/mean are (1, Wc) blocks with a constant index map -> same block stays
    # resident across grid steps; load once per step, broadcast in-register.
    std = std_ref[...]                      # (1, Wc)
    mean = mean_ref[...]                    # (1, Wc)
    yv = y_ref[...]                         # (TM, Wc)
    ypv = yp_ref[...]

    yd = yv * std + mean                    # denormalized targets
    diff = (yv - ypv) * std                 # yd - yd_pred (mean cancels)

    ehat = jnp.maximum(yd, emax)
    # Partridge–Schwenke weight; exact divide to stay bit-close to the reference.
    wgt = (jnp.tanh(-0.0006 * (ehat - emax)) + 1.0) * 0.5 / ehat

    if masked:
        # Zero the weight of padded elements: removes them from both the max and
        # the weighted sum (their diff is already 0).  Static branch: only traced
        # when padding exists.
        base = pl.program_id(0) * (tm * wc)
        ridx = jax.lax.broadcasted_iota(jnp.int32, (tm, wc), 0)
        cidx = jax.lax.broadcasted_iota(jnp.int32, (tm, wc), 1)
        flat = base + ridx * wc + cidx
        wgt = jnp.where(flat < n_valid, wgt, 0.0)

    contrib = wgt * diff * diff

    # Pure-VPU partial reduction: collapse whole-vreg row groups (8 sublanes and
    # 128 lanes stay intact).  Cross-lane/cross-sublane reduce happens once, in
    # the wrapper, not per tile.
    wsum_ref[...] = jnp.sum(contrib.reshape(tm // 8, 8, wc), axis=0)
    wmax_ref[...] = jnp.max(wgt.reshape(tm // 8, 8, wc), axis=0)


def wmse_loss_ps(y, y_pred, y_mean, y_std, emax=2000.0):
    """Pallas implementation of WMSELoss_PS.forward (Emax is a static hyperparam)."""
    y = jnp.asarray(y, jnp.float32)
    y_pred = jnp.asarray(y_pred, jnp.float32)
    if y.ndim == 1:
        y = y[:, None]
        y_pred = y_pred[:, None]
    n, f = y.shape
    y_std = jnp.broadcast_to(jnp.asarray(y_std, jnp.float32).reshape(-1), (f,))
    y_mean = jnp.broadcast_to(jnp.asarray(y_mean, jnp.float32).reshape(-1), (f,))

    total = n * f

    # Lane-dense working width: fold small F into full 128-lane rows when the
    # per-target std/mean pattern tiles evenly; otherwise keep F (full-extent
    # lane dim -> still correct, just possibly masked stores).
    if f % 128 == 0:
        wc = f
    elif 128 % f == 0:
        wc = 128
    else:
        wc = f
    rep = wc // f
    std_row = jnp.tile(y_std, rep)[None, :]     # (1, Wc)
    mean_row = jnp.tile(y_mean, rep)[None, :]   # (1, Wc)

    m0 = -(-total // wc)                        # working rows (ceil)

    # Row tile: as large as possible with each input block <= ~2 MiB, so
    # 2 inputs x 2 pipeline buffers stays far below scoped VMEM on v5e/v6e/v7x.
    max_block_bytes = 2 * 1024 * 1024
    tm_cap = max(8, (max_block_bytes // (wc * 4)) // 8 * 8)
    tm_target = min(1024, tm_cap)
    if m0 <= tm_target:
        tm = ((m0 + 7) // 8) * 8                # single grid step for small inputs
    else:
        tm = tm_target
    m = -(-m0 // tm) * tm
    padded = m * wc

    y_flat = y.reshape(-1)
    yp_flat = y_pred.reshape(-1)
    if padded != total:
        pad = padded - total
        y_flat = jnp.pad(y_flat, (0, pad))
        yp_flat = jnp.pad(yp_flat, (0, pad))
    y_w = y_flat.reshape(m, wc)
    yp_w = yp_flat.reshape(m, wc)

    grid_n = m // tm

    kernel = functools.partial(
        _wmse_ps_kernel, emax=float(emax), tm=tm, wc=wc,
        n_valid=total, masked=(padded != total))

    wsum_part, wmax_part = pl.pallas_call(
        kernel,
        out_shape=(jax.ShapeDtypeStruct((grid_n * 8, wc), jnp.float32),
                   jax.ShapeDtypeStruct((grid_n * 8, wc), jnp.float32)),
        grid=(grid_n,),
        in_specs=[
            pl.BlockSpec((tm, wc), lambda i: (i, 0)),
            pl.BlockSpec((tm, wc), lambda i: (i, 0)),
            pl.BlockSpec((1, wc), lambda i: (0, 0)),
            pl.BlockSpec((1, wc), lambda i: (0, 0)),
        ],
        out_specs=(
            pl.BlockSpec((8, wc), lambda i: (i, 0)),
            pl.BlockSpec((8, wc), lambda i: (i, 0)),
        ),
        compiler_params=pltpu.CompilerParams(
            dimension_semantics=("parallel",),
            vmem_limit_bytes=32 * 1024 * 1024),
    )(y_w, yp_w, std_row, mean_row)

    # Final (tiny) reductions + normalization in the wrapper:
    #   loss = sum(w*diff^2) / (max(w) * N*F)
    wmax = jnp.max(wmax_part)
    wsum = jnp.sum(wsum_part)
    return wsum / (wmax * jnp.float32(total))


def _reference(y, y_pred, y_mean, y_std, emax=2000.0):
    yd = y * y_std + y_mean
    yd_pred = y_pred * y_std + y_mean
    ehat = jnp.maximum(yd, emax)
    w = (jnp.tanh(-0.0006 * (ehat - emax)) + 1.0) / 2.0 / ehat
    w = w / jnp.max(w)
    return jnp.mean(w * (yd - yd_pred) ** 2)


if __name__ == "__main__":
    N, F = 16, 32
    EMAX = 2000.0

    key = jax.random.PRNGKey(0)
    k1, k2 = jax.random.split(key)
    y = jax.random.normal(k1, (N, F), dtype=jnp.float32)
    y_pred = jax.random.normal(k2, (N, F), dtype=jnp.float32)

    # Deterministic "set_scale" parameters chosen so the denormalized energies
    # straddle Emax (exercises both branches of the PS weight).
    y_mean = jnp.linspace(500.0, 3500.0, F, dtype=jnp.float32)
    y_std = jnp.linspace(50.0, 400.0, F, dtype=jnp.float32)

    out = wmse_loss_ps(y, y_pred, y_mean, y_std, emax=EMAX)
    out = jax.block_until_ready(out)

    ref = _reference(y, y_pred, y_mean, y_std, emax=EMAX)
    assert jnp.allclose(out, ref, rtol=1e-4, atol=1e-6), (out, ref)

    print("KERNEL_OK")
</pallas_src>

<mosaic_0001>
module attributes {stable_mosaic.version = 11 : i64} {
  func.func @_wmse_ps_kernel(%arg0: i32, %arg1: memref<8x128xf32, #tpu.memory_space<vmem>>, %arg2: memref<8x128xf32, #tpu.memory_space<vmem>>, %arg3: memref<1x128xf32, #tpu.memory_space<vmem>>, %arg4: memref<1x128xf32, #tpu.memory_space<vmem>>, %arg5: memref<8x128xf32, #tpu.memory_space<vmem>>, %arg6: memref<8x128xf32, #tpu.memory_space<vmem>>) attributes {dimension_semantics = [#tpu.dimension_semantics<parallel>], iteration_bounds = array<i64: 1>, scalar_prefetch = 0 : i64, scratch_operands = 0 : i64, tpu.core_type = #tpu.core_type<tc>, window_params = [{transform_indices = @transform_0, window_bounds = array<i64: 8, 128>}, {transform_indices = @transform_1, window_bounds = array<i64: 8, 128>}, {pipeline_mode = #tpu.pipeline_mode<synchronous>, transform_indices = @transform_2, window_bounds = array<i64: 1, 128>}, {pipeline_mode = #tpu.pipeline_mode<synchronous>, transform_indices = @transform_3, window_bounds = array<i64: 1, 128>}, {transform_indices = @transform_4, window_bounds = array<i64: 8, 128>}, {transform_indices = @transform_5, window_bounds = array<i64: 8, 128>}]} {
    %c0 = arith.constant 0 : index
    %c0_0 = arith.constant 0 : index
    %0 = vector.load %arg3[%c0, %c0_0] : memref<1x128xf32, #tpu.memory_space<vmem>>, vector<1x128xf32>
    %c0_1 = arith.constant 0 : index
    %c0_2 = arith.constant 0 : index
    %1 = vector.load %arg4[%c0_1, %c0_2] : memref<1x128xf32, #tpu.memory_space<vmem>>, vector<1x128xf32>
    %c0_3 = arith.constant 0 : index
    %c0_4 = arith.constant 0 : index
    %2 = vector.load %arg1[%c0_3, %c0_4] : memref<8x128xf32, #tpu.memory_space<vmem>>, vector<8x128xf32>
    %c0_5 = arith.constant 0 : index
    %c0_6 = arith.constant 0 : index
    %3 = vector.load %arg2[%c0_5, %c0_6] : memref<8x128xf32, #tpu.memory_space<vmem>>, vector<8x128xf32>
    %4 = vector.broadcast %0 : vector<1x128xf32> to vector<8x128xf32>
    %5 = arith.mulf %2, %4 : vector<8x128xf32>
    %6 = vector.broadcast %1 : vector<1x128xf32> to vector<8x128xf32>
    %7 = arith.addf %5, %6 : vector<8x128xf32>
    %8 = arith.subf %2, %3 : vector<8x128xf32>
    %9 = vector.broadcast %0 : vector<1x128xf32> to vector<8x128xf32>
    %10 = arith.mulf %8, %9 : vector<8x128xf32>
    %cst = arith.constant 2.000000e+03 : f32
    %11 = vector.broadcast %cst : f32 to vector<8x128xf32>
    %12 = arith.maximumf %7, %11 : vector<8x128xf32>
    %cst_7 = arith.constant 2.000000e+03 : f32
    %13 = vector.broadcast %cst_7 : f32 to vector<8x128xf32>
    %14 = arith.subf %12, %13 : vector<8x128xf32>
    %cst_8 = arith.constant -6.000000e-04 : f32
    %15 = vector.broadcast %cst_8 : f32 to vector<8x128xf32>
    %16 = arith.mulf %15, %14 : vector<8x128xf32>
    %17 = math.tanh %16 : vector<8x128xf32>
    %cst_9 = arith.constant 1.000000e+00 : f32
    %18 = vector.broadcast %cst_9 : f32 to vector<8x128xf32>
    %19 = arith.addf %17, %18 : vector<8x128xf32>
    %cst_10 = arith.constant 5.000000e-01 : f32
    %20 = vector.broadcast %cst_10 : f32 to vector<8x128xf32>
    %21 = arith.mulf %19, %20 : vector<8x128xf32>
    %22 = arith.divf %21, %12 : vector<8x128xf32>
    %c1024_i32 = arith.constant 1024 : i32
    %23 = arith.muli %arg0, %c1024_i32 : i32
    %24 = tpu.iota {dimensions = array<i32: 0>} : vector<8x128xi32>
    %25 = tpu.iota {dimensions = array<i32: 1>} : vector<8x128xi32>
    %c128_i32 = arith.constant 128 : i32
    %26 = vector.broadcast %c128_i32 : i32 to vector<8x128xi32>
    %27 = arith.muli %24, %26 : vector<8x128xi32>
    %28 = vector.broadcast %23 : i32 to vector<8x128xi32>
    %29 = arith.addi %28, %27 : vector<8x128xi32>
    %30 = arith.addi %29, %25 : vector<8x128xi32>
    %c512_i32 = arith.constant 512 : i32
    %31 = vector.broadcast %c512_i32 : i32 to vector<8x128xi32>
    %32 = arith.cmpi slt, %30, %31 : vector<8x128xi32>
    %cst_11 = arith.constant 0.000000e+00 : f32
    %33 = vector.broadcast %cst_11 : f32 to vector<8x128xf32>
    %34 = arith.select %32, %22, %33 : vector<8x128xi1>, vector<8x128xf32>
    %35 = arith.mulf %34, %10 : vector<8x128xf32>
    %36 = arith.mulf %35, %10 : vector<8x128xf32>
    %37 = vector.shape_cast %36 : vector<8x128xf32> to vector<1x8x128xf32>
    %cst_12 = arith.constant dense<0.000000e+00> : vector<8x128xf32>
    %38 = vector.multi_reduction <add>, %37, %cst_12 [0] : vector<1x8x128xf32> to vector<8x128xf32>
    %c0_13 = arith.constant 0 : index
    %c0_14 = arith.constant 0 : index
    %39 = vector.load %arg5[%c0_13, %c0_14] : memref<8x128xf32, #tpu.memory_space<vmem>>, vector<8x128xf32>
    tpu.vector_store %arg5[%c0_13, %c0_14], %38 {strides = array<i32>} : memref<8x128xf32, #tpu.memory_space<vmem>>, vector<8x128xf32>,
    %40 = vector.shape_cast %34 : vector<8x128xf32> to vector<1x8x128xf32>
    %cst_15 = arith.constant dense<0xFF800000> : vector<8x128xf32>
    %41 = vector.multi_reduction <maximumf>, %40, %cst_15 [0] : vector<1x8x128xf32> to vector<8x128xf32>
    %c0_16 = arith.constant 0 : index
    %c0_17 = arith.constant 0 : index
    %42 = vector.load %arg6[%c0_16, %c0_17] : memref<8x128xf32, #tpu.memory_space<vmem>>, vector<8x128xf32>
    tpu.vector_store %arg6[%c0_16, %c0_17], %41 {strides = array<i32>} : memref<8x128xf32, #tpu.memory_space<vmem>>, vector<8x128xf32>,
    return
  }
  func.func @transform_0(%arg0: i32) -> (i32, i32) {
    %c0_i32 = arith.constant 0 : i32
    %c0_i32_0 = arith.constant 0 : i32
    return %arg0, %c0_i32 : i32, i32
  }
  func.func @transform_1(%arg0: i32) -> (i32, i32) {
    %c0_i32 = arith.constant 0 : i32
    %c0_i32_0 = arith.constant 0 : i32
    return %arg0, %c0_i32 : i32, i32
  }
  func.func @transform_2(%arg0: i32) -> (i32, i32) {
    %c0_i32 = arith.constant 0 : i32
    %c0_i32_0 = arith.constant 0 : i32
    %c0_i32_1 = arith.constant 0 : i32
    return %c0_i32, %c0_i32_0 : i32, i32
  }
  func.func @transform_3(%arg0: i32) -> (i32, i32) {
    %c0_i32 = arith.constant 0 : i32
    %c0_i32_0 = arith.constant 0 : i32
    %c0_i32_1 = arith.constant 0 : i32
    return %c0_i32, %c0_i32_0 : i32, i32
  }
  func.func @transform_4(%arg0: i32) -> (i32, i32) {
    %c0_i32 = arith.constant 0 : i32
    %c0_i32_0 = arith.constant 0 : i32
    return %arg0, %c0_i32 : i32, i32
  }
  func.func @transform_5(%arg0: i32) -> (i32, i32) {
    %c0_i32 = arith.constant 0 : i32
    %c0_i32_0 = arith.constant 0 : i32
    return %arg0, %c0_i32 : i32, i32
  }
}

</mosaic_0001>

<llo_original>
// kernel: tpu_custom_call.1
$region0: #{tpu_custom_call.1}
  #allocation0 [shape = 'u32[]', space=smem, size = 0x4, offset = 0x4, fixed_abs, tag = 'smem constant byte address 0x4 - core index']
  #allocation1 [shape = 'u32[144,128]{1,0:T(1,128)}', space=vmem, size = 0x12000, scoped, tag = 'internal scratch']
  %s0 = inlined_call_operand.hbm [shape: f32[8,128], index: 0, kind: input, shape index: {}]
  %s1 = inlined_call_operand.hbm [shape: f32[8,128], index: 1, kind: input, shape index: {}]
  %s2 = inlined_call_operand.vmem [shape: f32[1,128], index: 2, kind: input, shape index: {}]
  %s3 = inlined_call_operand.vmem [shape: f32[1,128], index: 3, kind: input, shape index: {}]
  %s4 = inlined_call_operand.hbm [shape: f32[8,128], index: 4, kind: output, shape index: {0}]
  %s5 = inlined_call_operand.hbm [shape: f32[8,128], index: 5, kind: output, shape index: {1}]
  %6 = xla_tuple %s4, %s5
  %s7 = sld [smem:[#allocation0]]
  $region42: #{tpu_custom_call.1} parent=0
    _
  %s9 = ssub.s32 1, %s7
  %s10 = scalar_select 0, %s9, %s7
  $region1: #{tpu_custom_call.1} parent=0
    #allocation2 [shape = 'u8[4096]{0}', space=vmem, size = 0x1000, scoped, tag = 'input window, operand 0, single buffered']
    #allocation3 [shape = 's32[1]{0}', space=sflag, size = 0x4, scoped, tag = 'scoped memory for tpu_custom_call.1']
    #allocation4 [shape = 's32[1]{0}', space=sflag, size = 0x4, scoped, tag = 'scoped memory for tpu_custom_call.1']
    #allocation5 [shape = 'u8[4096]{0}', space=vmem, size = 0x1000, scoped, tag = 'input window, operand 1, single buffered']
    #allocation6 [shape = 's32[1]{0}', space=sflag, size = 0x4, scoped, tag = 'scoped memory for tpu_custom_call.1']
    #allocation7 [shape = 'u8[4096]{0}', space=vmem, size = 0x1000, scoped, tag = 'output window, operand 0, single buffered']
    #allocation8 [shape = 'u8[4096]{0}', space=vmem, size = 0x1000, scoped, tag = 'output window, operand 1, single buffered']
    #allocation9 [shape = 's32[1]{0}', space=sflag, size = 0x4, scoped, tag = 'scoped memory for tpu_custom_call.1']
    %11 = vsyncpa [#allocation3], 0
    %12 = vsyncpa [#allocation6], 0
    %13 = vsyncpa [#allocation4], 0
    %14 = vsyncpa [#allocation9], 0
    // Predicated region
    $region2: #{tpu_custom_call.1} parent=1 // pred_check
      _
    $region3: #{tpu_custom_call.1} parent=1 // pred_check_branch
      %16 = sbr.rel (0) target = $region5
    $region4: #{tpu_custom_call.1} parent=1 // pred_region
      %s18 = ssub.s32 128, 128
      %19 = vsyncadd [#allocation3], %s18
      %s21 = sshll.u32 [#allocation2], 4
      %s22 = int_to_ptr.vmem [resolvable:$true] %s21
      %24 = dma.hbm_to_vmem [thread:$0]  %s0, 128, %s22, [#allocation3]
    $region5: #{tpu_custom_call.1} parent=1 // pred_fallthru
      _
    // Predicated region
    $region6: #{tpu_custom_call.1} parent=1 // pred_check
      _
    $region7: #{tpu_custom_call.1} parent=1 // pred_check_branch
      %26 = sbr.rel (0) target = $region9
    $region8: #{tpu_custom_call.1} parent=1 // pred_region
      %s28 = ssub.s32 128, 128
      %29 = vsyncadd [#allocation6], %s28
      %s31 = sshll.u32 [#allocation5], 4
      %s32 = int_to_ptr.vmem [resolvable:$true] %s31
      %34 = dma.hbm_to_vmem [thread:$0]  %s1, 128, %s32, [#allocation6]
    $region9: #{tpu_custom_call.1} parent=1 // pred_fallthru
      _
    // Predicated region
    $region10: #{tpu_custom_call.1} parent=1 // pred_check
      _
    $region11: #{tpu_custom_call.1} parent=1 // pred_check_branch
      %36 = sbr.rel (0) target = $region13
    $region12: #{tpu_custom_call.1} parent=1 // pred_region
      _
    $region13: #{tpu_custom_call.1} parent=1 // pred_fallthru
      _
    // Predicated region
    $region14: #{tpu_custom_call.1} parent=1 // pred_check
      _
    $region15: #{tpu_custom_call.1} parent=1 // pred_check_branch
      %38 = sbr.rel (0) target = $region17
    $region16: #{tpu_custom_call.1} parent=1 // pred_region
      _
    $region17: #{tpu_custom_call.1} parent=1 // pred_fallthru
      _
    // Predicated region
    $region18: #{tpu_custom_call.1} parent=1 // pred_check
      _
    $region19: #{tpu_custom_call.1} parent=1 // pred_check_branch
      %40 = sbr.rel (0) target = $region21
    $region20: #{tpu_custom_call.1} parent=1 // pred_region
      %41 = dma.done [#allocation3], 128
    $region21: #{tpu_custom_call.1} parent=1 // pred_fallthru
      _
    // Predicated region
    $region22: #{tpu_custom_call.1} parent=1 // pred_check
      _
    $region23: #{tpu_custom_call.1} parent=1 // pred_check_branch
      %43 = sbr.rel (0) target = $region25
    $region24: #{tpu_custom_call.1} parent=1 // pred_region
      %44 = dma.done [#allocation6], 128
    $region25: #{tpu_custom_call.1} parent=1 // pred_fallthru
      _
    %v45 = vld [vmem:[%s2] sm:$0x1]
    %v46 = vld [vmem:[%s3] sm:$0x1]
    %v47 = vld [vmem:[#allocation2] sm:$0xff]
    %v48 = vld [vmem:[#allocation5] sm:$0xff]
    %v50 = vlaneseq
    %v51 = vshrl.u32 %v50, 7
    %v52 = vsub.s32 0, %v51
    %v53 = vrot.slane %v45, %v52
    %v55 = vmul.f32 %v47, %v53
    %v57 = vlaneseq
    %v58 = vshrl.u32 %v57, 7
    %v59 = vsub.s32 0, %v58
    %v60 = vrot.slane %v46, %v59
    %v62 = vadd.f32 %v55, %v60
    %v63 = vsub.f32 %v47, %v48
    %v64 = vmul.f32 %v63, %v53
    %v65 = vmax.f32 %v62, 2000.0
    %v66 = vsub.f32 %v65, 2000.0
    %v67 = vmul.f32 %v66, -0.0006
    %v68 = vtanh.pop %v67
    %v69 = vadd.f32 %v68, 1.0
    %v70 = vmul.f32 %v69, 0.5
    %v71 = vrcp.pop %v65
    %v72 = vmul.f32 %v70, %v71
    %s73 = smul.u32 0, 1024
    %v74 = vlaneseq
    %v75 = vshrl.u32 %v74, 7
    %v76 = vlaneseq
    %v77 = vand.u32 %v76, 127
    %v78 = vmul.u32 %v75, 128
    %v79 = vstv %s73
    %v80 = vadd.s32 %v79, %v78
    %v81 = vadd.s32 %v80, %v77
    %vm82 = vcmp.lt.s32.totalorder %v81, 512
    %v83 = vsel %vm82, %v72, 0.0
    %v84 = vmul.f32 %v83, %v64
    %v85 = vmul.f32 %v84, %v64
    %v86 = vadd.f32 %v85, 0.0
    %87 = vst [vmem:[#allocation7] sm:$0xff] %v86
    %88 = vst [vmem:[#allocation8] sm:$0xff] %v83
    // Predicated region
    $region26: #{tpu_custom_call.1} parent=1 // pred_check
      _
    $region27: #{tpu_custom_call.1} parent=1 // pred_check_branch
      %90 = sbr.rel (0) target = $region29
    $region28: #{tpu_custom_call.1} parent=1 // pred_region
      %s92 = ssub.s32 128, 128
      %93 = vsyncadd [#allocation4], %s92
      %s95 = sshll.u32 [#allocation7], 4
      %s96 = int_to_ptr.vmem [resolvable:$true] %s95
      %98 = dma.vmem_to_hbm [thread:$0]  %s96, 128, %s4, [#allocation4]
    $region29: #{tpu_custom_call.1} parent=1 // pred_fallthru
      _
    // Predicated region
    $region30: #{tpu_custom_call.1} parent=1 // pred_check
      _
    $region31: #{tpu_custom_call.1} parent=1 // pred_check_branch
      %100 = sbr.rel (0) target = $region33
    $region32: #{tpu_custom_call.1} parent=1 // pred_region
      %s102 = ssub.s32 128, 128
      %103 = vsyncadd [#allocation9], %s102
      %s105 = sshll.u32 [#allocation8], 4
      %s106 = int_to_ptr.vmem [resolvable:$true] %s105
      %108 = dma.vmem_to_hbm [thread:$0]  %s106, 128, %s5, [#allocation9]
    $region33: #{tpu_custom_call.1} parent=1 // pred_fallthru
      _
    // Predicated region
    $region34: #{tpu_custom_call.1} parent=1 // pred_check
      _
    $region35: #{tpu_custom_call.1} parent=1 // pred_check_branch
      %110 = sbr.rel (0) target = $region37
    $region36: #{tpu_custom_call.1} parent=1 // pred_region
      %111 = dma.done [#allocation4], 128
    $region37: #{tpu_custom_call.1} parent=1 // pred_fallthru
      _
    // Predicated region
    $region38: #{tpu_custom_call.1} parent=1 // pred_check
      _
    $region39: #{tpu_custom_call.1} parent=1 // pred_check_branch
      %113 = sbr.rel (0) target = $region41
    $region40: #{tpu_custom_call.1} parent=1 // pred_region
      %114 = dma.done [#allocation9], 128
    $region41: #{tpu_custom_call.1} parent=1 // pred_fallthru
      _
    %115 = vsyncpa [#allocation3], 1
    %116 = vsyncpa [#allocation6], 1
    %117 = vsyncpa [#allocation4], 1
    %118 = vsyncpa [#allocation9], 1

</llo_original>
